<compile_context>
chip_gen: v7x
topology: tpu7x:2x2x1
jax: 0.10.0
libtpu: 0.0.40
codegen_flags: <defaults>
</compile_context>

<pallas_src>
import functools

import jax
import jax.numpy as jnp
from jax.experimental import pallas as pl
from jax.experimental.pallas import tpu as pltpu


def _ce_kernel(x_ref, y_ref, col_ref, o_ref, *, n_total, tile_rows, tiles_per_chunk):
    j = pl.program_id(0)   # parallel chunk (megacore axis)
    i = pl.program_id(1)   # reduction tile within the chunk

    @pl.when(i == 0)
    def _init():
        o_ref[...] = jnp.zeros_like(o_ref)

    x = x_ref[...].astype(jnp.float32)       # (TN, C) upcast after DMA (bf16-friendly)
    labels = y_ref[...]                      # (TN, 1) int32
    col = col_ref[...]                       # (1, C)  int32, resident across all tiles

    # Numerically-stable softmax pieces; full-width work is one exp pass (EUP).
    m = jnp.max(x, axis=1, keepdims=True)                          # (TN, 1)
    e = jnp.exp(x - m)                                             # (TN, C)
    denom = jnp.sum(e, axis=1, keepdims=True)                      # (TN, 1)

    # Gather exp(x - m) at the label column: broadcasted compare + row reduce
    # (no one-hot matmul, no N*C log, no N*C divide).
    e_label = jnp.sum(jnp.where(col == labels, e, 0.0),
                      axis=1, keepdims=True)                       # (TN, 1)

    # Exact original semantics at the label: log(softmax(x)[label] + 1e-8).
    logp = jnp.log(e_label / denom + 1e-8)                         # (TN, 1)

    row_start = (j * tiles_per_chunk + i) * tile_rows

    @pl.when(row_start + tile_rows <= n_total)
    def _full_tile():
        o_ref[...] += jnp.sum(logp, axis=0, keepdims=True)

    @pl.when(row_start + tile_rows > n_total)
    def _tail_tile():
        # Mask rows past N (covers both a straddling tile and fully OOB tiles
        # created by chunk padding).  jnp.where lowers to a select, so any
        # NaN/Inf computed from clamped block-padding data is discarded.
        row = jax.lax.broadcasted_iota(jnp.int32, logp.shape, 0) + row_start
        o_ref[...] += jnp.sum(jnp.where(row < n_total, logp, 0.0),
                              axis=0, keepdims=True)


def _choose_tile_rows(n, c, *, target_f32_bytes=4 * 1024 * 1024):
    """Tile rows sized from the in-kernel f32 working set; no artificial row cap."""
    rows = max(1, target_f32_bytes // max(1, c * 4))
    rows = int(min(rows, n))
    if rows >= n:
        return n                        # block dim == full dim is always legal
    rows = max(8, (rows // 8) * 8)      # otherwise second-to-last dim must be %8
    return min(rows, n)


def one_hot_cross_entropy(x, y, *, tile_rows=None, num_chunks=None):
    """x: [N, C] logits (f32 or bf16), y: [N] int labels. Returns scalar f32 loss."""
    n, c = x.shape
    y2d = y.astype(jnp.int32).reshape(n, 1)
    col_iota = jax.lax.broadcasted_iota(jnp.int32, (1, c), 1)

    itemsize = jnp.dtype(x.dtype).itemsize
    if tile_rows is None:
        tile_rows = _choose_tile_rows(n, c)

    total_tiles = pl.cdiv(n, tile_rows)
    if num_chunks is None:
        num_chunks = 2 if total_tiles >= 2 else 1   # one chunk per TC on v7x
    num_chunks = max(1, min(int(num_chunks), total_tiles))
    tiles_per_chunk = pl.cdiv(total_tiles, num_chunks)
    grid = (num_chunks, tiles_per_chunk)

    # VMEM budget from the real working set: double-buffered input stream
    # (streamed dtype) + ~4x f32 intermediates (x upcast, exp, select/mask) +
    # slack.  Stay well under v7x's 64 MiB per-TC VMEM.
    in_block_bytes = tile_rows * c * itemsize
    f32_block_bytes = tile_rows * c * 4
    vmem_limit = 2 * in_block_bytes + 4 * f32_block_bytes + (4 << 20)
    vmem_limit = int(min(48 << 20, max(16 << 20, vmem_limit)))

    kernel = functools.partial(
        _ce_kernel, n_total=n, tile_rows=tile_rows, tiles_per_chunk=tiles_per_chunk)

    def row_map(j, i):
        return (j * tiles_per_chunk + i, 0)

    partials = pl.pallas_call(
        kernel,
        out_shape=jax.ShapeDtypeStruct((num_chunks, 1, 1), jnp.float32),
        grid=grid,
        in_specs=[
            pl.BlockSpec((tile_rows, c), row_map),          # logits stream
            pl.BlockSpec((tile_rows, 1), row_map),          # labels stream
            pl.BlockSpec((1, c), lambda j, i: (0, 0)),      # resident column iota
        ],
        out_specs=pl.BlockSpec((None, 1, 1), lambda j, i: (j, 0, 0)),
        compiler_params=pltpu.CompilerParams(
            dimension_semantics=("parallel", "arbitrary"),
            vmem_limit_bytes=vmem_limit,
        ),
    )(x, y2d, col_iota)

    # Final reduce / negate / mean over the (tiny) per-chunk partials in JAX.
    return -jnp.sum(partials) / jnp.float32(n)


def _reference(x, y):
    p = jax.nn.softmax(x.astype(jnp.float32), axis=1)
    oh = jax.nn.one_hot(y, x.shape[-1], dtype=jnp.float32)
    return -jnp.mean(jnp.sum(oh * jnp.log(p + 1e-8), axis=1), axis=0)


if __name__ == "__main__":
    key = jax.random.PRNGKey(0)
    kx, ky, kx2, ky2 = jax.random.split(key, 4)

    # Case 1: small batch of logits over 32 classes (single tile, single chunk).
    N, C = 8, 32
    x = jax.random.normal(kx, (N, C), dtype=jnp.float32)
    y = jax.random.randint(ky, (N,), 0, C, dtype=jnp.int32)

    loss = one_hot_cross_entropy(x, y)
    jax.block_until_ready(loss)
    ref = _reference(x, y)
    assert jnp.allclose(loss, ref, atol=1e-5, rtol=1e-5), (loss, ref)

    # Case 2: exercises the parallel chunk axis, multi-tile accumulation, and
    # padded / fully-OOB tile masking (20 rows, 8-row tiles, 2 chunks x 2 tiles).
    N2, C2 = 20, 160
    x2 = jax.random.normal(kx2, (N2, C2), dtype=jnp.float32)
    y2 = jax.random.randint(ky2, (N2,), 0, C2, dtype=jnp.int32)

    loss2 = one_hot_cross_entropy(x2, y2, tile_rows=8)
    jax.block_until_ready(loss2)
    ref2 = _reference(x2, y2)
    assert jnp.allclose(loss2, ref2, atol=1e-5, rtol=1e-5), (loss2, ref2)

    print("KERNEL_OK")
</pallas_src>

<mosaic_0001>
module attributes {stable_mosaic.version = 11 : i64} {
  func.func @_ce_kernel(%arg0: i32, %arg1: i32, %arg2: memref<8x32xf32, #tpu.memory_space<vmem>>, %arg3: memref<8x1xi32, #tpu.memory_space<vmem>>, %arg4: memref<1x32xi32, #tpu.memory_space<vmem>>, %arg5: memref<1x1x1xf32, #tpu.memory_space<vmem>>) attributes {dimension_semantics = [#tpu.dimension_semantics<parallel>, #tpu.dimension_semantics<arbitrary>], iteration_bounds = array<i64: 1, 1>, scalar_prefetch = 0 : i64, scratch_operands = 0 : i64, tpu.core_type = #tpu.core_type<tc>, window_params = [{transform_indices = @transform_0, window_bounds = array<i64: 8, 32>}, {transform_indices = @transform_1, window_bounds = array<i64: 8, 1>}, {pipeline_mode = #tpu.pipeline_mode<synchronous>, transform_indices = @transform_2, window_bounds = array<i64: 1, 32>}, {transform_indices = @transform_3, window_bounds = array<i64: 1, 1, 1>}]} {
    %c0_i32 = arith.constant 0 : i32
    %0 = arith.cmpi eq, %arg1, %c0_i32 : i32
    %1 = arith.extui %0 : i1 to i32
    %c0_i32_0 = arith.constant 0 : i32
    %2 = arith.cmpi ne, %1, %c0_i32_0 : i32
    scf.if %2 {
      %cst_16 = arith.constant 0.000000e+00 : f32
      %35 = vector.broadcast %cst_16 : f32 to vector<1x1xf32>
      %c0_17 = arith.constant 0 : index
      %c0_18 = arith.constant 0 : index
      %c0_19 = arith.constant 0 : index
      %36 = vector.load %arg5[%c0_17, %c0_18, %c0_19] : memref<1x1x1xf32, #tpu.memory_space<vmem>>, vector<1x1x1xf32>
      %37 = vector.shape_cast %36 : vector<1x1x1xf32> to vector<1x1xf32>
      %38 = vector.shape_cast %35 : vector<1x1xf32> to vector<1x1x1xf32>
      tpu.vector_store %arg5[%c0_17, %c0_18, %c0_19], %38 {strides = array<i32>} : memref<1x1x1xf32, #tpu.memory_space<vmem>>, vector<1x1x1xf32>,
    } else {
    }
    %c0 = arith.constant 0 : index
    %c0_1 = arith.constant 0 : index
    %3 = vector.load %arg2[%c0, %c0_1] : memref<8x32xf32, #tpu.memory_space<vmem>>, vector<8x32xf32>
    %c0_2 = arith.constant 0 : index
    %c0_3 = arith.constant 0 : index
    %4 = vector.load %arg3[%c0_2, %c0_3] : memref<8x1xi32, #tpu.memory_space<vmem>>, vector<8x1xi32>
    %c0_4 = arith.constant 0 : index
    %c0_5 = arith.constant 0 : index
    %5 = vector.load %arg4[%c0_4, %c0_5] : memref<1x32xi32, #tpu.memory_space<vmem>>, vector<1x32xi32>
    %cst = arith.constant dense<0xFF800000> : vector<8xf32>
    %6 = vector.multi_reduction <maximumf>, %3, %cst [1] : vector<8x32xf32> to vector<8xf32>
    %7 = vector.shape_cast %6 : vector<8xf32> to vector<8x1xf32>
    %8 = vector.broadcast %7 : vector<8x1xf32> to vector<8x32xf32>
    %9 = arith.subf %3, %8 : vector<8x32xf32>
    %10 = math.exp %9 : vector<8x32xf32>
    %cst_6 = arith.constant dense<0.000000e+00> : vector<8xf32>
    %11 = vector.multi_reduction <add>, %10, %cst_6 [1] : vector<8x32xf32> to vector<8xf32>
    %12 = vector.shape_cast %11 : vector<8xf32> to vector<8x1xf32>
    %13 = vector.broadcast %5 : vector<1x32xi32> to vector<8x32xi32>
    %14 = vector.broadcast %4 : vector<8x1xi32> to vector<8x32xi32>
    %15 = arith.cmpi eq, %13, %14 : vector<8x32xi32>
    %cst_7 = arith.constant 0.000000e+00 : f32
    %16 = vector.broadcast %cst_7 : f32 to vector<8x32xf32>
    %17 = arith.select %15, %10, %16 : vector<8x32xi1>, vector<8x32xf32>
    %cst_8 = arith.constant dense<0.000000e+00> : vector<8xf32>
    %18 = vector.multi_reduction <add>, %17, %cst_8 [1] : vector<8x32xf32> to vector<8xf32>
    %19 = vector.shape_cast %18 : vector<8xf32> to vector<8x1xf32>
    %20 = arith.divf %19, %12 : vector<8x1xf32>
    %cst_9 = arith.constant 9.99999993E-9 : f32
    %21 = vector.broadcast %cst_9 : f32 to vector<8x1xf32>
    %22 = arith.addf %20, %21 : vector<8x1xf32>
    %23 = math.log %22 : vector<8x1xf32>
    %c1_i32 = arith.constant 1 : i32
    %24 = arith.muli %arg0, %c1_i32 : i32
    %25 = arith.addi %24, %arg1 : i32
    %c8_i32 = arith.constant 8 : i32
    %26 = arith.muli %25, %c8_i32 : i32
    %c8_i32_10 = arith.constant 8 : i32
    %27 = arith.addi %26, %c8_i32_10 : i32
    %c8_i32_11 = arith.constant 8 : i32
    %28 = arith.cmpi sle, %27, %c8_i32_11 : i32
    %29 = arith.extui %28 : i1 to i32
    %c0_i32_12 = arith.constant 0 : i32
    %30 = arith.cmpi ne, %29, %c0_i32_12 : i32
    scf.if %30 {
      %c0_16 = arith.constant 0 : index
      %c0_17 = arith.constant 0 : index
      %c0_18 = arith.constant 0 : index
      %35 = vector.load %arg5[%c0_16, %c0_17, %c0_18] : memref<1x1x1xf32, #tpu.memory_space<vmem>>, vector<1x1x1xf32>
      %36 = vector.shape_cast %35 : vector<1x1x1xf32> to vector<1x1xf32>
      %cst_19 = arith.constant dense<0.000000e+00> : vector<1xf32>
      %37 = vector.multi_reduction <add>, %23, %cst_19 [0] : vector<8x1xf32> to vector<1xf32>
      %38 = vector.shape_cast %37 : vector<1xf32> to vector<1x1xf32>
      %39 = arith.addf %36, %38 : vector<1x1xf32>
      %c0_20 = arith.constant 0 : index
      %c0_21 = arith.constant 0 : index
      %c0_22 = arith.constant 0 : index
      %40 = vector.load %arg5[%c0_20, %c0_21, %c0_22] : memref<1x1x1xf32, #tpu.memory_space<vmem>>, vector<1x1x1xf32>
      %41 = vector.shape_cast %40 : vector<1x1x1xf32> to vector<1x1xf32>
      %42 = vector.shape_cast %39 : vector<1x1xf32> to vector<1x1x1xf32>
      tpu.vector_store %arg5[%c0_20, %c0_21, %c0_22], %42 {strides = array<i32>} : memref<1x1x1xf32, #tpu.memory_space<vmem>>, vector<1x1x1xf32>,
    } else {
    }
    %c8_i32_13 = arith.constant 8 : i32
    %31 = arith.addi %26, %c8_i32_13 : i32
    %c8_i32_14 = arith.constant 8 : i32
    %32 = arith.cmpi sgt, %31, %c8_i32_14 : i32
    %33 = arith.extui %32 : i1 to i32
    %c0_i32_15 = arith.constant 0 : i32
    %34 = arith.cmpi ne, %33, %c0_i32_15 : i32
    scf.if %34 {
      %35 = tpu.iota {dimensions = array<i32: 0>} : vector<8x1xi32>
      %36 = vector.broadcast %26 : i32 to vector<8x1xi32>
      %37 = arith.addi %35, %36 : vector<8x1xi32>
      %c0_16 = arith.constant 0 : index
      %c0_17 = arith.constant 0 : index
      %c0_18 = arith.constant 0 : index
      %38 = vector.load %arg5[%c0_16, %c0_17, %c0_18] : memref<1x1x1xf32, #tpu.memory_space<vmem>>, vector<1x1x1xf32>
      %39 = vector.shape_cast %38 : vector<1x1x1xf32> to vector<1x1xf32>
      %c8_i32_19 = arith.constant 8 : i32
      %40 = vector.broadcast %c8_i32_19 : i32 to vector<8x1xi32>
      %41 = arith.cmpi slt, %37, %40 : vector<8x1xi32>
      %cst_20 = arith.constant 0.000000e+00 : f32
      %42 = vector.broadcast %cst_20 : f32 to vector<8x1xf32>
      %43 = arith.select %41, %23, %42 : vector<8x1xi1>, vector<8x1xf32>
      %cst_21 = arith.constant dense<0.000000e+00> : vector<1xf32>
      %44 = vector.multi_reduction <add>, %43, %cst_21 [0] : vector<8x1xf32> to vector<1xf32>
      %45 = vector.shape_cast %44 : vector<1xf32> to vector<1x1xf32>
      %46 = arith.addf %39, %45 : vector<1x1xf32>
      %c0_22 = arith.constant 0 : index
      %c0_23 = arith.constant 0 : index
      %c0_24 = arith.constant 0 : index
      %47 = vector.load %arg5[%c0_22, %c0_23, %c0_24] : memref<1x1x1xf32, #tpu.memory_space<vmem>>, vector<1x1x1xf32>
      %48 = vector.shape_cast %47 : vector<1x1x1xf32> to vector<1x1xf32>
      %49 = vector.shape_cast %46 : vector<1x1xf32> to vector<1x1x1xf32>
      tpu.vector_store %arg5[%c0_22, %c0_23, %c0_24], %49 {strides = array<i32>} : memref<1x1x1xf32, #tpu.memory_space<vmem>>, vector<1x1x1xf32>,
    } else {
    }
    return
  }
  func.func @transform_0(%arg0: i32, %arg1: i32) -> (i32, i32) {
    %c1_i32 = arith.constant 1 : i32
    %0 = arith.muli %arg0, %c1_i32 : i32
    %1 = arith.addi %0, %arg1 : i32
    %c0_i32 = arith.constant 0 : i32
    %c0_i32_0 = arith.constant 0 : i32
    return %1, %c0_i32 : i32, i32
  }
  func.func @transform_1(%arg0: i32, %arg1: i32) -> (i32, i32) {
    %c1_i32 = arith.constant 1 : i32
    %0 = arith.muli %arg0, %c1_i32 : i32
    %1 = arith.addi %0, %arg1 : i32
    %c0_i32 = arith.constant 0 : i32
    %c0_i32_0 = arith.constant 0 : i32
    return %1, %c0_i32 : i32, i32
  }
  func.func @transform_2(%arg0: i32, %arg1: i32) -> (i32, i32) {
    %c0_i32 = arith.constant 0 : i32
    %c0_i32_0 = arith.constant 0 : i32
    %c0_i32_1 = arith.constant 0 : i32
    return %c0_i32, %c0_i32_0 : i32, i32
  }
  func.func @transform_3(%arg0: i32, %arg1: i32) -> (i32, i32, i32) {
    %c0_i32 = arith.constant 0 : i32
    %c0_i32_0 = arith.constant 0 : i32
    %c0_i32_1 = arith.constant 0 : i32
    return %arg0, %c0_i32, %c0_i32_0 : i32, i32, i32
  }
}

</mosaic_0001>

<llo_original>
// kernel: tpu_custom_call.1
$region0: #{tpu_custom_call.1}
  #allocation0 [shape = 'u32[]', space=smem, size = 0x4, offset = 0x4, fixed_abs, tag = 'smem constant byte address 0x4 - core index']
  #allocation1 [shape = 'u32[144,128]{1,0:T(1,128)}', space=vmem, size = 0x12000, scoped, tag = 'internal scratch']
  %s0 = inlined_call_operand.vmem [shape: f32[8,32], index: 0, kind: input, shape index: {}]
  %s1 = inlined_call_operand.vmem [shape: s32[8,1], index: 1, kind: input, shape index: {}]
  %s2 = inlined_call_operand.vmem [shape: s32[1,32], index: 2, kind: input, shape index: {}]
  %s3 = inlined_call_operand.hbm [shape: f32[1,1,1], index: 3, kind: output, shape index: {}]
  %s4 = sld [smem:[#allocation0]]
  $region34: #{tpu_custom_call.1} parent=0
    _
  %s6 = ssub.s32 1, %s4
  %s7 = scalar_select 0, %s6, %s4
  $region1: #{tpu_custom_call.1} parent=0
    #allocation2 [shape = 'u8[512]{0}', space=vmem, size = 0x400, scoped, tag = 'output window, operand 0, single buffered']
    #allocation3 [shape = 's32[1]{0}', space=sflag, size = 0x4, scoped, tag = 'scoped memory for tpu_custom_call.1']
    %8 = vsyncpa [#allocation3], 0
    // Predicated region
    $region2: #{tpu_custom_call.1} parent=1 // pred_check
      _
    $region3: #{tpu_custom_call.1} parent=1 // pred_check_branch
      %10 = sbr.rel (0) target = $region5
    $region4: #{tpu_custom_call.1} parent=1 // pred_region
      %s11 = sadd.s32 0, 0
      %p12 = scmp.lt.s32.totalorder %s11, 0
      %s13 = scalar_select %p12, %s11, 0
      %s14 = smul.addr %s13, 8
      %s15 = scalar_lea.vmem %s0, %s14
      %s16 = sadd.s32 0, 0
    $region5: #{tpu_custom_call.1} parent=1 // pred_fallthru
      _
    // Predicated region
    $region6: #{tpu_custom_call.1} parent=1 // pred_check
      _
    $region7: #{tpu_custom_call.1} parent=1 // pred_check_branch
      %18 = sbr.rel (0) target = $region9
    $region8: #{tpu_custom_call.1} parent=1 // pred_region
      %s19 = sadd.s32 0, 0
      %p20 = scmp.lt.s32.totalorder %s19, 0
      %s21 = scalar_select %p20, %s19, 0
      %s22 = smul.addr %s21, 8
      %s23 = scalar_lea.vmem %s1, %s22
      %s24 = sadd.s32 0, 0
    $region9: #{tpu_custom_call.1} parent=1 // pred_fallthru
      _
    // Predicated region
    $region10: #{tpu_custom_call.1} parent=1 // pred_check
      _
    $region11: #{tpu_custom_call.1} parent=1 // pred_check_branch
      %26 = sbr.rel (0) target = $region13
    $region12: #{tpu_custom_call.1} parent=1 // pred_region
      _
    $region13: #{tpu_custom_call.1} parent=1 // pred_fallthru
      _
    %s27 = sadd.s32 0, 0
    %p28 = scmp.lt.s32.totalorder %s27, 0
    %s29 = scalar_select %p28, %s27, 0
    %s30 = smul.addr %s29, 8
    %s31 = scalar_lea.vmem %s0, %s30
    %s32 = sadd.s32 0, 0
    %p33 = scmp.lt.s32.totalorder %s32, 0
    %s34 = scalar_select %p33, %s32, 0
    %s35 = smul.addr %s34, 8
    %s36 = scalar_lea.vmem %s1, %s35
    %s37 = sadd.s32 0, 0
    %p38 = scmp.lt.s32.totalorder %s37, 0
    %s39 = scalar_select %p38, %s37, 0
    %s40 = smul.addr %s39, 8
    %s41 = scalar_lea.vmem %s0, %s40
    %s42 = sadd.s32 0, 0
    %s43 = sadd.s32 0, 0
    %p44 = scmp.lt.s32.totalorder %s43, 0
    %s45 = scalar_select %p44, %s43, 0
    %s46 = smul.addr %s45, 8
    %s47 = scalar_lea.vmem %s1, %s46
    %s48 = sadd.s32 0, 0
    %p49 = scmp.eq.s32.totalorder 0, 0
    // Predicated region
    $region14: #{tpu_custom_call.1} parent=1 // pred_check
      %p50 = pneg %p49
    $region15: #{tpu_custom_call.1} parent=1 // pred_check_branch
      %52 = sbr.rel (%p50) target = $region17
    $region16: #{tpu_custom_call.1} parent=1 // pred_region
      %vm53 = vcmask 0
      %54 = vst.msk [vmem:[#allocation2] sm:$0x1] %vm53, 0.0
    $region17: #{tpu_custom_call.1} parent=1 // pred_fallthru
      _
    %v55 = vld [vmem:[%s41] sm:$0xff]
    %v56 = vld [vmem:[%s47] sm:$0xff]
    %v57 = vld [vmem:[%s2] sm:$0x1]
    %vm58 = vcmask 261120
    %v59 = vsel %vm58, %v55, -inf
    %60 = vmax.xlane.f32.xlu0 %v59
    %v61 = vpop.xlane.xlu0 %60
    %v62 = vsub.f32 %v55, %v61
    %v63 = vmul.f32 %v62, 1.442695
    %v64 = vpow.pop %v63
    %v65 = vsel %vm58, %v64, 0.0
    %66 = vadd.xlane.f32.xlu0 %v65
    %v67 = vpop.xlane.xlu0 %66
    %v68 = vlaneseq
    %v69 = vshrl.u32 %v68, 7
    %v70 = vsub.s32 0, %v69
    %v71 = vrot.slane %v57, %v70
    %72 = vset.pattern.permute.xlu0 0
    %73 = vperm.xlu0 %72, %v56
    %v74 = vpop.permute.xlu0 %73
    %vm75 = vcmp.eq.s32.totalorder %v71, %v74
    %v76 = vsel %vm75, %v64, 0.0
    %v77 = vsel %vm58, %v76, 0.0
    %78 = vadd.xlane.f32.xlu0 %v77
    %v79 = vpop.xlane.xlu0 %78
    %v80 = vrcp.pop %v67
    %v81 = vmul.f32 %v79, %v80
    %v82 = vadd.f32 %v81, 1e-08
    %v83 = vlog2.pop %v82
    %v84 = vmul.f32 %v83, 0.6931472
    %s85 = sadd.s32 0, 0
    %s86 = smul.u32 %s85, 8
    %s87 = sadd.s32 %s86, 8
    %p88 = scmp.le.s32.totalorder %s87, 8
    // Predicated region
    $region18: #{tpu_custom_call.1} parent=1 // pred_check
      %p89 = pneg %p88
    $region19: #{tpu_custom_call.1} parent=1 // pred_check_branch
      %91 = sbr.rel (%p89) target = $region21
    $region20: #{tpu_custom_call.1} parent=1 // pred_region
      %v92 = vld [vmem:[#allocation2] sm:$0x1]
      %v93 = vrot.slane %v84, 4
      %v94 = vadd.f32 %v84, %v93
      %v95 = vrot.slane %v94, 2
      %v96 = vadd.f32 %v94, %v95
      %v97 = vrot.slane %v96, 1
      %v98 = vadd.f32 %v96, %v97
      %v99 = vadd.f32 %v92, %v98
      %vm100 = vcmask 0
      %101 = vst.msk [vmem:[#allocation2] sm:$0x1] %vm100, %v99
    $region21: #{tpu_custom_call.1} parent=1 // pred_fallthru
      _
    %p102 = scmp.gt.s32.totalorder %s87, 8
    // Predicated region
    $region22: #{tpu_custom_call.1} parent=1 // pred_check
      %p103 = pneg %p102
    $region23: #{tpu_custom_call.1} parent=1 // pred_check_branch
      %105 = sbr.rel (%p103) target = $region25
    $region24: #{tpu_custom_call.1} parent=1 // pred_region
      %v106 = vlaneseq
      %v107 = vshrl.u32 %v106, 7
      %v108 = vstv %s86
      %v109 = vadd.s32 %v107, %v108
      %v110 = vld [vmem:[#allocation2] sm:$0x1]
      %vm111 = vcmp.lt.s32.totalorder %v109, 8
      %v112 = vsel %vm111, %v84, 0.0
      %v113 = vrot.slane %v112, 4
      %v114 = vadd.f32 %v112, %v113
      %v115 = vrot.slane %v114, 2
      %v116 = vadd.f32 %v114, %v115
      %v117 = vrot.slane %v116, 1
      %v118 = vadd.f32 %v116, %v117
      %v119 = vadd.f32 %v110, %v118
      %vm120 = vcmask 0
      %121 = vst.msk [vmem:[#allocation2] sm:$0x1] %vm120, %v119
    $region25: #{tpu_custom_call.1} parent=1 // pred_fallthru
      _
    // Predicated region
    $region26: #{tpu_custom_call.1} parent=1 // pred_check
      _
    $region27: #{tpu_custom_call.1} parent=1 // pred_check_branch
      %123 = sbr.rel (0) target = $region29
    $region28: #{tpu_custom_call.1} parent=1 // pred_region
      %s125 = ssub.s32 16, 16
      %126 = vsyncadd [#allocation3], %s125
      %s128 = sshll.u32 [#allocation2], 4
      %s129 = int_to_ptr.vmem [resolvable:$true] %s128
      %131 = dma.vmem_to_hbm [thread:$0]  %s129, 16, %s3, [#allocation3]
    $region29: #{tpu_custom_call.1} parent=1 // pred_fallthru
      _
    // Predicated region
    $region30: #{tpu_custom_call.1} parent=1 // pred_check
      _
    $region31: #{tpu_custom_call.1} parent=1 // pred_check_branch
      %133 = sbr.rel (0) target = $region33
    $region32: #{tpu_custom_call.1} parent=1 // pred_region
      %134 = dma.done [#allocation3], 16
    $region33: #{tpu_custom_call.1} parent=1 // pred_fallthru
      _
    %135 = vsyncpa [#allocation3], 1

</llo_original>
